<compile_context>
chip_gen: v5e
topology: v5e:2x2
jax: 0.10.0
libtpu: 0.0.40
codegen_flags: <defaults>
</compile_context>

<pallas_src>
import numpy as np
import jax
import jax.numpy as jnp
from jax.experimental import pallas as pl
from jax.experimental.pallas import tpu as pltpu


# ----------------------------------------------------------------------------------
# Size helper mirroring TransposeConv1dLayerSizes:
#   ConvTranspose1d (padding=0):  out_len = (in_len - 1) * stride + kernel_size
# ----------------------------------------------------------------------------------
class TransposeConv1dLayerSizes:
    def __init__(self, in_len, out_len, in_ch, out_ch, stride):
        self.in_len = in_len
        self.out_len = out_len
        self.in_ch = in_ch
        self.out_ch = out_ch
        self.stride = stride
        self.kernel_size = out_len - (in_len - 1) * stride
        assert self.kernel_size >= 1, "invalid transpose-conv sizing"


# ----------------------------------------------------------------------------------
# Pallas kernel:  out = relu(x_aug @ M1) @ M2        (biases folded into M1 / M2)
# ----------------------------------------------------------------------------------
def generator_kernel(x_ref, m1_ref, m2_ref, o_ref):
    h = jnp.dot(x_ref[...], m1_ref[...], preferred_element_type=jnp.float32)
    h = jnp.maximum(h, 0.0)                                     # ReLU (bias-1 column stays 1)
    o_ref[...] = jnp.dot(h, m2_ref[...], preferred_element_type=jnp.float32)


def generator_forward(x_aug, m1, m2, *, tile_b):
    B_pad, K_pad = x_aug.shape
    _, H_pad = m1.shape
    _, N_pad = m2.shape
    grid = (B_pad // tile_b,)
    return pl.pallas_call(
        generator_kernel,
        out_shape=jax.ShapeDtypeStruct((B_pad, N_pad), jnp.float32),
        grid=grid,
        in_specs=[
            pl.BlockSpec((tile_b, K_pad), lambda i: (i, 0)),
            pl.BlockSpec((K_pad, H_pad), lambda i: (0, 0)),
            pl.BlockSpec((H_pad, N_pad), lambda i: (0, 0)),
        ],
        out_specs=pl.BlockSpec((tile_b, N_pad), lambda i: (i, 0)),
        compiler_params=pltpu.CompilerParams(
            dimension_semantics=("parallel",)),
    )(x_aug, m1, m2)


# ----------------------------------------------------------------------------------
# Glue: dense scatter matrix for ConvTranspose1d (PyTorch weight shape (in_ch, out_ch, k)):
#   out[b, co, i*stride + t] += sum_ci x[b, ci, i] * W[ci, co, t]   (+ bias[co])
# ----------------------------------------------------------------------------------
def deconv_to_matrix(W, in_len, out_len, stride):
    in_ch, out_ch, k = W.shape
    M = np.zeros((in_ch * in_len, out_ch * out_len), np.float32)
    for ci in range(in_ch):
        for i in range(in_len):
            for co in range(out_ch):
                for t in range(k):
                    o = i * stride + t
                    M[ci * in_len + i, co * out_len + o] += W[ci, co, t]
    return M


def expand_bias(b, out_len):
    # per-channel bias broadcast over all output positions, flattened NCL
    return np.repeat(np.asarray(b, np.float32), out_len)


def _round_up(x, m):
    return ((x + m - 1) // m) * m


def build_generator_operands(W1, b1, W2, b2, d1, d2):
    """Fold biases and pad to TPU-friendly shapes.

    Returns (M1_aug, M2_aug, K1, K_pad, N2) where
      M1_aug: (K_pad, H_pad)   x columns [0:K1] real, column K1 is the ones column
      M2_aug: (H_pad, N_pad)   hidden column BIAS_COL carries b2
    """
    K1 = d1.in_ch * d1.in_len            # 4
    N1 = d1.out_ch * d1.out_len          # 160
    N2 = d2.out_ch * d2.out_len          # 16

    K_aug = K1 + 1                       # ones column for b1/b2 folding
    K_pad = _round_up(K_aug, 8)          # sublane-friendly contraction dim -> 8
    H_pad = _round_up(N1 + 1, 128)       # 161 -> 256 (clean vregs / one 256-wide MXU pass)
    N_pad = _round_up(N2, 128)           # 16  -> 128 (lane-dense output stores)
    BIAS_COL = N1                        # constant-1 hidden column index

    M1d = deconv_to_matrix(W1, d1.in_len, d1.out_len, d1.stride)      # (K1, N1)
    M2d = deconv_to_matrix(W2, d2.in_len, d2.out_len, d2.stride)      # (N1, N2)

    M1_aug = np.zeros((K_pad, H_pad), np.float32)
    M1_aug[:K1, :N1] = M1d
    M1_aug[K1, :N1] = expand_bias(b1, d1.out_len)                     # b1 row (via ones col)
    M1_aug[K1, BIAS_COL] = 1.0                                        # relu(1) == 1

    M2_aug = np.zeros((H_pad, N_pad), np.float32)
    M2_aug[:N1, :N2] = M2d
    M2_aug[BIAS_COL, :N2] = expand_bias(b2, d2.out_len)               # b2 row

    return M1_aug, M2_aug, K1, K_pad, N2


def generator_apply(x_ncl, M1_aug, M2_aug, K1, K_pad, N2, out_ch, out_len):
    """x_ncl: (B, Ci, Lin) float32  ->  (B, out_ch, out_len) float32."""
    B = x_ncl.shape[0]
    x_flat = np.asarray(x_ncl, np.float32).reshape(B, -1)             # (B, K1) flattened NCL

    # batch padding / tiling: sublane multiple of 8, tile at most 128 rows per grid step
    B8 = _round_up(B, 8)
    TB = min(128, B8)
    B_pad = _round_up(B8, TB)

    x_aug = np.zeros((B_pad, K_pad), np.float32)
    x_aug[:B, :K1] = x_flat
    x_aug[:, K1] = 1.0                                                # ones column (bias fold)

    out_pad = generator_forward(jnp.asarray(x_aug), jnp.asarray(M1_aug),
                                jnp.asarray(M2_aug), tile_b=TB)
    out_pad = jax.block_until_ready(out_pad)
    out = np.asarray(out_pad)[:B, :N2].reshape(B, out_ch, out_len)
    return out


# ----------------------------------------------------------------------------------
# Pure numpy reference of the PyTorch forward, for correctness check
# ----------------------------------------------------------------------------------
def ref_conv_transpose1d(x, W, b, stride):
    B, Ci, Lin = x.shape
    _, Co, K = W.shape
    Lout = (Lin - 1) * stride + K
    out = np.zeros((B, Co, Lout), np.float32)
    for bidx in range(B):
        for co in range(Co):
            for ci in range(Ci):
                for i in range(Lin):
                    for t in range(K):
                        out[bidx, co, i * stride + t] += x[bidx, ci, i] * W[ci, co, t]
            out[bidx, co, :] += b[co]
    return out


def ref_generator(x, W1, b1, W2, b2, s1, s2):
    h = ref_conv_transpose1d(x, W1, b1, s1)
    h = np.maximum(h, 0.0)
    return ref_conv_transpose1d(h, W2, b2, s2)


if __name__ == "__main__":
    # small, module-consistent shapes
    signal_len = 16
    noise_len = 4
    batch = 2

    d1 = TransposeConv1dLayerSizes(in_len=noise_len, out_len=round(signal_len / 2),
                                   in_ch=1, out_ch=20, stride=2)
    d2 = TransposeConv1dLayerSizes(in_len=d1.out_len, out_len=signal_len,
                                   in_ch=d1.out_ch, out_ch=1, stride=2)

    key = jax.random.PRNGKey(0)
    k_x, k_w1, k_b1, k_w2, k_b2 = jax.random.split(key, 5)

    # deterministic synthetic parameters (shapes match nn.ConvTranspose1d)
    W1 = np.asarray(jax.random.normal(k_w1, (d1.in_ch, d1.out_ch, d1.kernel_size),
                                      jnp.float32) * 0.1)
    b1 = np.asarray(jax.random.normal(k_b1, (d1.out_ch,), jnp.float32) * 0.1)
    W2 = np.asarray(jax.random.normal(k_w2, (d2.in_ch, d2.out_ch, d2.kernel_size),
                                      jnp.float32) * 0.1)
    b2 = np.asarray(jax.random.normal(k_b2, (d2.out_ch,), jnp.float32) * 0.1)

    # input noise, NCL: (batch, 1, noise_len)
    x = np.asarray(jax.random.normal(k_x, (batch, 1, noise_len), jnp.float32))

    # lower the two transposed convs to padded, bias-folded matmul operands (setup glue)
    M1_aug, M2_aug, K1, K_pad, N2 = build_generator_operands(W1, b1, W2, b2, d1, d2)

    out = generator_apply(x, M1_aug, M2_aug, K1, K_pad, N2,
                          out_ch=d2.out_ch, out_len=d2.out_len)       # (B, 1, signal_len)

    # correctness check vs direct ConvTranspose1d semantics
    expected = ref_generator(x, W1, b1, W2, b2, d1.stride, d2.stride)
    np.testing.assert_allclose(out, expected, rtol=1e-5, atol=1e-5)

    print("KERNEL_OK")
</pallas_src>

<mosaic_0001>
module attributes {stable_mosaic.version = 11 : i64} {
  func.func @generator_kernel(%arg0: i32, %arg1: memref<8x8xf32, #tpu.memory_space<vmem>>, %arg2: memref<8x256xf32, #tpu.memory_space<vmem>>, %arg3: memref<256x128xf32, #tpu.memory_space<vmem>>, %arg4: memref<8x128xf32, #tpu.memory_space<vmem>>) attributes {dimension_semantics = [#tpu.dimension_semantics<parallel>], iteration_bounds = array<i64: 1>, scalar_prefetch = 0 : i64, scratch_operands = 0 : i64, tpu.core_type = #tpu.core_type<tc>, window_params = [{transform_indices = @transform_0, window_bounds = array<i64: 8, 8>}, {pipeline_mode = #tpu.pipeline_mode<synchronous>, transform_indices = @transform_1, window_bounds = array<i64: 8, 256>}, {pipeline_mode = #tpu.pipeline_mode<synchronous>, transform_indices = @transform_2, window_bounds = array<i64: 256, 128>}, {transform_indices = @transform_3, window_bounds = array<i64: 8, 128>}]} {
    %c0 = arith.constant 0 : index
    %c0_0 = arith.constant 0 : index
    %0 = vector.load %arg1[%c0, %c0_0] : memref<8x8xf32, #tpu.memory_space<vmem>>, vector<8x8xf32>
    %c0_1 = arith.constant 0 : index
    %c0_2 = arith.constant 0 : index
    %1 = vector.load %arg2[%c0_1, %c0_2] : memref<8x256xf32, #tpu.memory_space<vmem>>, vector<8x256xf32>
    %cst = arith.constant dense<0.000000e+00> : vector<8x256xf32>
    %2 = tpu.matmul %0, %1, %cst {dimension_numbers = #tpu.dot_dimension_numbers<[1], [0], [0], [1], [0, 0, 1, 1], [], []>} : vector<8x8xf32>, vector<8x256xf32>, vector<8x256xf32> -> vector<8x256xf32>
    %cst_3 = arith.constant 0.000000e+00 : f32
    %3 = vector.broadcast %cst_3 : f32 to vector<8x256xf32>
    %4 = arith.maximumf %2, %3 : vector<8x256xf32>
    %c0_4 = arith.constant 0 : index
    %c0_5 = arith.constant 0 : index
    %5 = vector.load %arg3[%c0_4, %c0_5] : memref<256x128xf32, #tpu.memory_space<vmem>>, vector<256x128xf32>
    %cst_6 = arith.constant dense<0.000000e+00> : vector<8x128xf32>
    %6 = tpu.matmul %4, %5, %cst_6 {dimension_numbers = #tpu.dot_dimension_numbers<[1], [0], [0], [1], [0, 0, 1, 1], [], []>} : vector<8x256xf32>, vector<256x128xf32>, vector<8x128xf32> -> vector<8x128xf32>
    %c0_7 = arith.constant 0 : index
    %c0_8 = arith.constant 0 : index
    %7 = vector.load %arg4[%c0_7, %c0_8] : memref<8x128xf32, #tpu.memory_space<vmem>>, vector<8x128xf32>
    tpu.vector_store %arg4[%c0_7, %c0_8], %6 {strides = array<i32>} : memref<8x128xf32, #tpu.memory_space<vmem>>, vector<8x128xf32>,
    return
  }
  func.func @transform_0(%arg0: i32) -> (i32, i32) {
    %c0_i32 = arith.constant 0 : i32
    %c0_i32_0 = arith.constant 0 : i32
    return %arg0, %c0_i32 : i32, i32
  }
  func.func @transform_1(%arg0: i32) -> (i32, i32) {
    %c0_i32 = arith.constant 0 : i32
    %c0_i32_0 = arith.constant 0 : i32
    %c0_i32_1 = arith.constant 0 : i32
    return %c0_i32, %c0_i32_0 : i32, i32
  }
  func.func @transform_2(%arg0: i32) -> (i32, i32) {
    %c0_i32 = arith.constant 0 : i32
    %c0_i32_0 = arith.constant 0 : i32
    %c0_i32_1 = arith.constant 0 : i32
    return %c0_i32, %c0_i32_0 : i32, i32
  }
  func.func @transform_3(%arg0: i32) -> (i32, i32) {
    %c0_i32 = arith.constant 0 : i32
    %c0_i32_0 = arith.constant 0 : i32
    return %arg0, %c0_i32 : i32, i32
  }
}

</mosaic_0001>

<llo_original>
// kernel: tpu_custom_call.1
$region0: #{tpu_custom_call.1}
  #allocation0 [shape = 'u32[]', space=smem, size = 0x4, offset = 0x4, fixed_abs, tag = 'smem constant byte address 0x4 - core index']
  #allocation1 [shape = 'u32[72,128]{1,0:T(1,128)}', space=vmem, size = 0x9000, scoped, tag = 'internal scratch']
  %s0 = inlined_call_operand.hbm [shape: f32[8,8], index: 0, kind: input, shape index: {}]
  %s1 = inlined_call_operand.hbm [shape: f32[8,256], index: 1, kind: input, shape index: {}]
  %s2 = inlined_call_operand.hbm [shape: f32[256,128], index: 2, kind: input, shape index: {}]
  %s3 = inlined_call_operand.hbm [shape: f32[8,128], index: 3, kind: output, shape index: {}]
  %s4 = sld [smem:[#allocation0]]
  $region34: #{tpu_custom_call.1} parent=0
    _
  %s6 = ssub.s32 1, %s4
  %s7 = scalar_select 0, %s6, %s4
  $region1: #{tpu_custom_call.1} parent=0
    #allocation2 [shape = 'u8[4096]{0}', space=vmem, size = 0x1000, scoped, tag = 'input window, operand 0, single buffered']
    #allocation3 [shape = 's32[1]{0}', space=sflag, size = 0x4, scoped, tag = 'scoped memory for tpu_custom_call.1']
    #allocation4 [shape = 's32[1]{0}', space=sflag, size = 0x4, scoped, tag = 'scoped memory for tpu_custom_call.1']
    #allocation5 [shape = 'u8[8192]{0}', space=vmem, size = 0x2000, scoped, tag = 'input window, operand 1, single buffered']
    #allocation6 [shape = 's32[1]{0}', space=sflag, size = 0x4, scoped, tag = 'scoped memory for tpu_custom_call.1']
    #allocation7 [shape = 'u8[131072]{0}', space=vmem, size = 0x20000, scoped, tag = 'input window, operand 2, single buffered']
    #allocation8 [shape = 'u8[4096]{0}', space=vmem, size = 0x1000, scoped, tag = 'output window, operand 0, single buffered']
    %8 = vsyncpa [#allocation3], 0
    %9 = vsyncpa [#allocation6], 0
    %10 = vsyncpa [#allocation4], 0
    // Predicated region
    $region2: #{tpu_custom_call.1} parent=1 // pred_check
      _
    $region3: #{tpu_custom_call.1} parent=1 // pred_check_branch
      %12 = sbr.rel (0) target = $region5
    $region4: #{tpu_custom_call.1} parent=1 // pred_region
      %14 = vsyncadd [#allocation3], 0
      %s16 = sshll.u32 %s0, 4
      %s17 = int_to_ptr.hbm [resolvable:$true] %s16
      %s18 = sshll.u32 [#allocation2], 4
      %s19 = int_to_ptr.vmem [resolvable:$true] %s18
      %21 = dma.hbm_to_vmem [thread:$0]  %s17, 128, %s19, [#allocation3]
    $region5: #{tpu_custom_call.1} parent=1 // pred_fallthru
      _
    // Predicated region
    $region6: #{tpu_custom_call.1} parent=1 // pred_check
      _
    $region7: #{tpu_custom_call.1} parent=1 // pred_check_branch
      %23 = sbr.rel (0) target = $region9
    $region8: #{tpu_custom_call.1} parent=1 // pred_region
      %25 = vsyncadd [#allocation6], 0
      %s27 = sshll.u32 %s1, 4
      %s28 = int_to_ptr.hbm [resolvable:$true] %s27
      %s29 = sshll.u32 [#allocation5], 4
      %s30 = int_to_ptr.vmem [resolvable:$true] %s29
      %32 = dma.hbm_to_vmem [thread:$0]  %s28, 256, %s30, [#allocation6]
    $region9: #{tpu_custom_call.1} parent=1 // pred_fallthru
      _
    // Predicated region
    $region10: #{tpu_custom_call.1} parent=1 // pred_check
      _
    $region11: #{tpu_custom_call.1} parent=1 // pred_check_branch
      %34 = sbr.rel (0) target = $region13
    $region12: #{tpu_custom_call.1} parent=1 // pred_region
      %36 = vsyncadd [#allocation6], 0
      %s37 = sshll.u32 %s2, 4
      %s38 = int_to_ptr.hbm [resolvable:$true] %s37
      %s39 = sshll.u32 [#allocation7], 4
      %s40 = int_to_ptr.vmem [resolvable:$true] %s39
      %45 = dma.hbm_to_vmem [thread:$0]  %s38, 4096, %s40, [#allocation6], 128, 128, 8
    $region13: #{tpu_custom_call.1} parent=1 // pred_fallthru
      _
    // Predicated region
    $region14: #{tpu_custom_call.1} parent=1 // pred_check
      _
    $region15: #{tpu_custom_call.1} parent=1 // pred_check_branch
      %47 = sbr.rel (0) target = $region17
    $region16: #{tpu_custom_call.1} parent=1 // pred_region
      %49 = dma.done [#allocation3], 128
    $region17: #{tpu_custom_call.1} parent=1 // pred_fallthru
      _
    // Predicated region
    $region18: #{tpu_custom_call.1} parent=1 // pred_check
      _
    $region19: #{tpu_custom_call.1} parent=1 // pred_check_branch
      %51 = sbr.rel (0) target = $region21
    $region20: #{tpu_custom_call.1} parent=1 // pred_region
      %53 = dma.done [#allocation6], 256
    $region21: #{tpu_custom_call.1} parent=1 // pred_fallthru
      _
    // Predicated region
    $region22: #{tpu_custom_call.1} parent=1 // pred_check
      _
    $region23: #{tpu_custom_call.1} parent=1 // pred_check_branch
      %55 = sbr.rel (0) target = $region25
    $region24: #{tpu_custom_call.1} parent=1 // pred_region
      %57 = dma.done [#allocation6], 4096
    $region25: #{tpu_custom_call.1} parent=1 // pred_fallthru
      _
    %v58 = vld [vmem:[#allocation2] sm:$0xff]
    %v59 = vld [vmem:[#allocation5] sm:$0xff]
    %v60 = vld [vmem:[#allocation5 + $0x8] sm:$0xff]
    %vm61 = vcmask 64512
    %v63 = vsel %vm61, %v58, 0
    %65 = vmatpush.msra.mxu0 0.0
    %66 = vmatpush.msra.mxu0 0.0
    %67 = vmatpush.msra.mxu0 0.0
    %68 = vmatpush.msra.mxu0 0.0
    %69 = vmatpush.msra.mxu0 0.0
    %70 = vmatpush.msra.mxu0 0.0
    %71 = vmatpush.msra.mxu0 0.0
    %72 = vmatpush.msra.mxu0 0.0
    %73 = vmatpush.msra.mxu0 0.0
    %74 = vmatpush.msra.mxu0 0.0
    %75 = vmatpush.msra.mxu0 0.0
    %76 = vmatpush.msra.mxu0 0.0
    %77 = vmatpush.msra.mxu0 0.0
    %78 = vmatpush.msra.mxu0 0.0
    %79 = vmatpush.msra.mxu0 0.0
    %80 = vmatpush.msra.mxu0 %v59
    %81 = vmatmul.f32.gmra.mxu0 %v63
    %v82 = vpop.f32.mrf.mxu0
    %v83 = vadd.f32 0.0, %v82
    %84 = vdwg.mxu0
    %85 = vmatpush.msra.mxu0 0.0
    %86 = vmatpush.msra.mxu0 0.0
    %87 = vmatpush.msra.mxu0 0.0
    %88 = vmatpush.msra.mxu0 0.0
    %89 = vmatpush.msra.mxu0 0.0
    %90 = vmatpush.msra.mxu0 0.0
    %91 = vmatpush.msra.mxu0 0.0
    %92 = vmatpush.msra.mxu0 0.0
    %93 = vmatpush.msra.mxu0 0.0
    %94 = vmatpush.msra.mxu0 0.0
    %95 = vmatpush.msra.mxu0 0.0
    %96 = vmatpush.msra.mxu0 0.0
    %97 = vmatpush.msra.mxu0 0.0
    %98 = vmatpush.msra.mxu0 0.0
    %99 = vmatpush.msra.mxu0 0.0
    %100 = vmatpush.msra.mxu0 %v60
    %101 = vmatmul.f32.gmra.mxu0 %v63
    %v102 = vpop.f32.mrf.mxu0
    %v103 = vadd.f32 0.0, %v102
    %104 = vdwg.mxu0
    %v105 = vmax.f32 %v83, 0.0
    %v106 = vmax.f32 %v103, 0.0
    %v107 = vld [vmem:[#allocation7] sm:$0xff]
    %v108 = vld [vmem:[#allocation7 + $0x8] sm:$0xff]
    %v109 = vld [vmem:[#allocation7 + $0x10] sm:$0xff]
    %v110 = vld [vmem:[#allocation7 + $0x18] sm:$0xff]
    %v111 = vld [vmem:[#allocation7 + $0x20] sm:$0xff]
    %v112 = vld [vmem:[#allocation7 + $0x28] sm:$0xff]
    %v113 = vld [vmem:[#allocation7 + $0x30] sm:$0xff]
    %v114 = vld [vmem:[#allocation7 + $0x38] sm:$0xff]
    %v115 = vld [vmem:[#allocation7 + $0x40] sm:$0xff]
    %v116 = vld [vmem:[#allocation7 + $0x48] sm:$0xff]
    %v117 = vld [vmem:[#allocation7 + $0x50] sm:$0xff]
    %v118 = vld [vmem:[#allocation7 + $0x58] sm:$0xff]
    %v119 = vld [vmem:[#allocation7 + $0x60] sm:$0xff]
    %v120 = vld [vmem:[#allocation7 + $0x68] sm:$0xff]
    %v121 = vld [vmem:[#allocation7 + $0x70] sm:$0xff]
    %v122 = vld [vmem:[#allocation7 + $0x78] sm:$0xff]
    %v123 = vld [vmem:[#allocation7 + $0x80] sm:$0xff]
    %v124 = vld [vmem:[#allocation7 + $0x88] sm:$0xff]
    %v125 = vld [vmem:[#allocation7 + $0x90] sm:$0xff]
    %v126 = vld [vmem:[#allocation7 + $0x98] sm:$0xff]
    %v127 = vld [vmem:[#allocation7 + $0xa0] sm:$0xff]
    %v128 = vld [vmem:[#allocation7 + $0xa8] sm:$0xff]
    %v129 = vld [vmem:[#allocation7 + $0xb0] sm:$0xff]
    %v130 = vld [vmem:[#allocation7 + $0xb8] sm:$0xff]
    %v131 = vld [vmem:[#allocation7 + $0xc0] sm:$0xff]
    %v132 = vld [vmem:[#allocation7 + $0xc8] sm:$0xff]
    %v133 = vld [vmem:[#allocation7 + $0xd0] sm:$0xff]
    %v134 = vld [vmem:[#allocation7 + $0xd8] sm:$0xff]
    %v135 = vld [vmem:[#allocation7 + $0xe0] sm:$0xff]
    %v136 = vld [vmem:[#allocation7 + $0xe8] sm:$0xff]
    %v137 = vld [vmem:[#allocation7 + $0xf0] sm:$0xff]
    %v138 = vld [vmem:[#allocation7 + $0xf8] sm:$0xff]
    %139 = vmatpush.msra.mxu0 %v122
    %140 = vmatpush.msra.mxu0 %v121
    %141 = vmatpush.msra.mxu0 %v120
    %142 = vmatpush.msra.mxu0 %v119
    %143 = vmatpush.msra.mxu0 %v118
    %144 = vmatpush.msra.mxu0 %v117
    %145 = vmatpush.msra.mxu0 %v116
    %146 = vmatpush.msra.mxu0 %v115
    %147 = vmatpush.msra.mxu0 %v114
    %148 = vmatpush.msra.mxu0 %v113
    %149 = vmatpush.msra.mxu0 %v112
    %150 = vmatpush.msra.mxu0 %v111
    %151 = vmatpush.msra.mxu0 %v110
    %152 = vmatpush.msra.mxu0 %v109
    %153 = vmatpush.msra.mxu0 %v108
    %154 = vmatpush.msra.mxu0 %v107
    %155 = vmatmul.f32.gmra.mxu0 %v105
    %v156 = vpop.f32.mrf.mxu0
    %v157 = vadd.f32 0.0, %v156
    %158 = vdwg.mxu0
    %159 = vmatpush.msra.mxu0 %v138
    %160 = vmatpush.msra.mxu0 %v137
    %161 = vmatpush.msra.mxu0 %v136
    %162 = vmatpush.msra.mxu0 %v135
    %163 = vmatpush.msra.mxu0 %v134
    %164 = vmatpush.msra.mxu0 %v133
    %165 = vmatpush.msra.mxu0 %v132
    %166 = vmatpush.msra.mxu0 %v131
    %167 = vmatpush.msra.mxu0 %v130
    %168 = vmatpush.msra.mxu0 %v129
    %169 = vmatpush.msra.mxu0 %v128
    %170 = vmatpush.msra.mxu0 %v127
    %171 = vmatpush.msra.mxu0 %v126
    %172 = vmatpush.msra.mxu0 %v125
    %173 = vmatpush.msra.mxu0 %v124
    %174 = vmatpush.msra.mxu0 %v123
    %175 = vmatmul.f32.gmra.mxu0 %v106
    %v176 = vpop.f32.mrf.mxu0
    %v177 = vadd.f32 %v157, %v176
    %178 = vdwg.mxu0
    %179 = vst [vmem:[#allocation8] sm:$0xff] %v177
    // Predicated region
    $region26: #{tpu_custom_call.1} parent=1 // pred_check
      _
    $region27: #{tpu_custom_call.1} parent=1 // pred_check_branch
      %181 = sbr.rel (0) target = $region29
    $region28: #{tpu_custom_call.1} parent=1 // pred_region
      %183 = vsyncadd [#allocation4], 0
      %s185 = sshll.u32 [#allocation8], 4
      %s186 = int_to_ptr.vmem [resolvable:$true] %s185
      %s187 = sshll.u32 %s3, 4
      %s188 = int_to_ptr.hbm [resolvable:$true] %s187
      %190 = dma.vmem_to_hbm [thread:$0]  %s186, 128, %s188, [#allocation4]
    $region29: #{tpu_custom_call.1} parent=1 // pred_fallthru
      _
    // Predicated region
    $region30: #{tpu_custom_call.1} parent=1 // pred_check
      _
    $region31: #{tpu_custom_call.1} parent=1 // pred_check_branch
      %192 = sbr.rel (0) target = $region33
    $region32: #{tpu_custom_call.1} parent=1 // pred_region
      %194 = dma.done [#allocation4], 128
    $region33: #{tpu_custom_call.1} parent=1 // pred_fallthru
      _
    %195 = vsyncpa [#allocation3], 1
    %196 = vsyncpa [#allocation6], 1
    %197 = vsyncpa [#allocation4], 1

</llo_original>
